<compile_context>
chip_gen: v5e
topology: v5e:2x2
jax: 0.10.0
libtpu: 0.0.40
codegen_flags: <defaults>
</compile_context>

<pallas_src>
import functools

import numpy as np
import jax
import jax.numpy as jnp
from jax import lax
from jax.experimental import pallas as pl
from jax.experimental.pallas import tpu as pltpu

_LANES = 128
_NEG_SLOPE = 0.05
_SHIFTS = tuple((dz, dy, dx) for dz in (0, 1) for dy in (0, 1) for dx in (0, 1))


def _leaky(x):
    return jnp.where(x >= 0, x, _NEG_SLOPE * x)


def _upsample_kernel(w_ref, b_ref, m_ref, x_ref, cat_ref,
                     out_conv_ref, out_cat_ref, s_ref, *, cin, d, h, w):
    # w_ref  : (8*cout, kpad)    f32 VMEM  per-parity effective weights (zero padded)
    # b_ref  : (8*cout, 1)       f32 VMEM  bias replicated over parities
    # m_ref  : (kpad, spatial)   f32 VMEM  0/1 boundary mask per (tap, ci) row
    # x_ref  : (1, cin, spatial) f32 VMEM  raw volume, flattened spatial
    # cat_ref: (1, 8*ccat, spatial)        skip connection, flat NCDHW
    # out_conv_ref: (1, 8*cout, spatial)   conv result, parity-major rows
    # out_cat_ref : (1, 8*ccat, spatial)   LeakyReLU(cat), flat NCDHW
    # s_ref  : (kpad, spatial)   f32 VMEM  scratch: shifted-input stack
    spatial = d * h * w
    x = x_ref[0]                                           # (cin, spatial)

    # Assemble the shifted input stack S[t*cin + ci, f] = x[ci, f + off_t]
    # (a slide in the flattened index; row/plane crossings and the padded
    #  contraction rows are zeroed by the mask / the zero init).
    s_ref[...] = jnp.zeros_like(s_ref)
    for t, (dz, dy, dx) in enumerate(_SHIFTS):
        off = dz * h * w + dy * w + dx
        s_ref[t * cin:(t + 1) * cin, 0:spatial - off] = x[:, off:]
    s = s_ref[...] * m_ref[...]                            # zero out-of-range taps

    # All 8 output parities at once on the MXU, f32 accumulation.
    conv = jnp.dot(w_ref[...], s, preferred_element_type=jnp.float32)
    conv = conv + b_ref[...]                               # (8*cout,1) lane broadcast
    out_conv_ref[0] = _leaky(conv)

    # Skip connection: LeakyReLU in flat, lane-dense layout (no parity shuffle).
    out_cat_ref[0] = _leaky(cat_ref[0])


def _tap_mask(cin, kpad, d, h, w):
    """0/1 validity mask per (tap, ci) row of the shifted stack, numpy constant."""
    m, j, l = np.meshgrid(np.arange(d), np.arange(h), np.arange(w), indexing="ij")
    rows = []
    for dz, dy, dx in _SHIFTS:
        valid = (m + dz < d) & (j + dy < h) & (l + dx < w)
        rows.append(np.broadcast_to(valid.reshape(-1), (cin, d * h * w)))
    mask = np.concatenate(rows, axis=0).astype(np.float32)          # (8*cin, spatial)
    if kpad > 8 * cin:
        mask = np.concatenate(
            [mask, np.zeros((kpad - 8 * cin, d * h * w), np.float32)], axis=0)
    return mask                                                      # (kpad, spatial)


def prepare_params(weight, bias):
    """weight: (Cin, Cout, 3, 3, 3) ConvTranspose3d layout; bias: (Cout,).

    Returns (w2d, b2d): effective per-parity weights as an MXU-friendly
    (8*Cout, Kpad) matrix (Kpad = 8*Cin rounded up to 128) and bias (8*Cout, 1).
    Call once; weights are constant across calls.
    """
    cin, cout = weight.shape[0], weight.shape[1]
    w = weight.astype(jnp.float32)
    # For k=3, stride=2, pad=1: even output index uses tap k=1 at input shift 0;
    # odd output index uses tap k=2 at shift 0 and tap k=0 at shift 1.
    kmap = {(0, 0): 1, (1, 0): 2, (1, 1): 0}
    zeros = jnp.zeros((cout, cin), jnp.float32)
    par_blocks = []
    for pz in (0, 1):
        for py in (0, 1):
            for px in (0, 1):
                taps = []
                for dz, dy, dx in _SHIFTS:
                    if (pz, dz) in kmap and (py, dy) in kmap and (px, dx) in kmap:
                        kd, kh, kw = kmap[(pz, dz)], kmap[(py, dy)], kmap[(px, dx)]
                        taps.append(w[:, :, kd, kh, kw].T)            # (Cout, Cin)
                    else:
                        taps.append(zeros)
                par_blocks.append(jnp.stack(taps, axis=1))            # (Cout, 8, Cin)
    w_eff = jnp.stack(par_blocks, axis=0)                             # (8, Cout, 8, Cin)
    kdim = 8 * cin
    kpad = ((kdim + _LANES - 1) // _LANES) * _LANES
    w2d = jnp.zeros((8 * cout, kpad), jnp.float32)
    w2d = w2d.at[:, :kdim].set(w_eff.reshape(8 * cout, kdim))
    b2d = jnp.tile(bias.astype(jnp.float32), 8).reshape(8 * cout, 1)
    return w2d, b2d


@jax.jit
def spatial_up_sampling(volume, cat, w2d, b2d):
    """volume: (N,Cin,D,H,W); cat: (N,Ccat,2D,2H,2W);
    (w2d, b2d) = prepare_params(ConvTranspose3d weight/bias)."""
    n, cin, d, h, w = volume.shape
    ccat = cat.shape[1]
    cout = w2d.shape[0] // 8
    kpad = w2d.shape[1]
    spatial = d * h * w
    assert cat.shape == (n, ccat, 2 * d, 2 * h, 2 * w)
    assert spatial % _LANES == 0, "D*H*W must be a multiple of 128"
    # TODO(synk): pad the flattened spatial axis when D*H*W % 128 != 0.

    x_flat = volume.astype(jnp.float32).reshape(n, cin, spatial)
    cat_flat = cat.astype(jnp.float32).reshape(n, 8 * ccat, spatial)
    mask = jnp.asarray(_tap_mask(cin, kpad, d, h, w))     # trace-time constant

    kernel = functools.partial(_upsample_kernel, cin=cin, d=d, h=h, w=w)
    grid_spec = pltpu.PrefetchScalarGridSpec(
        num_scalar_prefetch=0,
        grid=(n,),
        in_specs=[
            pl.BlockSpec((8 * cout, kpad), lambda i: (0, 0)),          # weights
            pl.BlockSpec((8 * cout, 1), lambda i: (0, 0)),             # bias
            pl.BlockSpec((kpad, spatial), lambda i: (0, 0)),           # tap mask
            pl.BlockSpec((1, cin, spatial), lambda i: (i, 0, 0)),      # volume
            pl.BlockSpec((1, 8 * ccat, spatial), lambda i: (i, 0, 0)), # skip
        ],
        out_specs=[
            pl.BlockSpec((1, 8 * cout, spatial), lambda i: (i, 0, 0)),
            pl.BlockSpec((1, 8 * ccat, spatial), lambda i: (i, 0, 0)),
        ],
        scratch_shapes=[pltpu.VMEM((kpad, spatial), jnp.float32)],
    )
    flops = 2 * n * (8 * cout) * kpad * spatial
    bytes_accessed = 4 * (w2d.size + b2d.size + mask.size + x_flat.size
                          + 2 * cat_flat.size + n * 8 * cout * spatial)
    out_conv, out_cat = pl.pallas_call(
        kernel,
        grid_spec=grid_spec,
        out_shape=(jax.ShapeDtypeStruct((n, 8 * cout, spatial), jnp.float32),
                   jax.ShapeDtypeStruct((n, 8 * ccat, spatial), jnp.float32)),
        compiler_params=pltpu.CompilerParams(
            dimension_semantics=("parallel",),
            vmem_limit_bytes=32 * 1024 * 1024),
        cost_estimate=pl.CostEstimate(
            flops=flops, transcendentals=0, bytes_accessed=bytes_accessed),
    )(w2d, b2d, mask, x_flat, cat_flat)

    # Parity interleave back to NCDHW (layout plumbing only): z=2m+pz, y=2j+py, x=2l+px.
    conv_nchw = (out_conv.reshape(n, 2, 2, 2, cout, d, h, w)
                 .transpose(0, 4, 5, 1, 6, 2, 7, 3)
                 .reshape(n, cout, 2 * d, 2 * h, 2 * w))
    cat_nchw = out_cat.reshape(n, ccat, 2 * d, 2 * h, 2 * w)
    return jnp.concatenate([conv_nchw, cat_nchw], axis=1)


if __name__ == "__main__":
    key = jax.random.PRNGKey(0)
    k1, k2, k3, k4 = jax.random.split(key, 4)

    N, Cin, Cout, Ccat = 2, 4, 4, 4
    D = H = W = 8                                    # output spatial = 16

    volume = jax.random.normal(k1, (N, Cin, D, H, W), jnp.float32)
    cat = jax.random.normal(k2, (N, Ccat, 2 * D, 2 * H, 2 * W), jnp.float32)

    # Deterministic ConvTranspose3d parameters: (in_chans, out_chans, 3, 3, 3).
    bound = 1.0 / np.sqrt(Cin * 27)
    weight = jax.random.uniform(k3, (Cin, Cout, 3, 3, 3), jnp.float32, -bound, bound)
    bias = jax.random.uniform(k4, (Cout,), jnp.float32, -bound, bound)

    w2d, b2d = prepare_params(weight, bias)          # one-time weight prep
    out = jax.block_until_ready(spatial_up_sampling(volume, cat, w2d, b2d))

    # Pure-JAX reference (ConvTranspose3d == dilated conv with flipped kernel).
    w_flip = jnp.transpose(weight, (1, 0, 2, 3, 4))[:, :, ::-1, ::-1, ::-1]
    conv = lax.conv_general_dilated(
        volume, w_flip, window_strides=(1, 1, 1),
        padding=[(1, 2), (1, 2), (1, 2)], lhs_dilation=(2, 2, 2),
        dimension_numbers=("NCDHW", "OIDHW", "NCDHW"),
        precision=lax.Precision.HIGHEST)
    conv = conv + bias[None, :, None, None, None]
    ref = jnp.concatenate([conv, cat], axis=1)
    ref = jnp.where(ref >= 0, ref, 0.05 * ref)

    np.testing.assert_allclose(np.asarray(out), np.asarray(ref), rtol=2e-3, atol=2e-3)
    print("KERNEL_OK")
</pallas_src>

<mosaic_0001>
module attributes {stable_mosaic.version = 11 : i64} {
  func.func @_upsample_kernel(%arg0: i32, %arg1: memref<32x128xf32, #tpu.memory_space<vmem>>, %arg2: memref<32x1xf32, #tpu.memory_space<vmem>>, %arg3: memref<128x512xf32, #tpu.memory_space<vmem>>, %arg4: memref<1x4x512xf32, #tpu.memory_space<vmem>>, %arg5: memref<1x32x512xf32, #tpu.memory_space<vmem>>, %arg6: memref<1x32x512xf32, #tpu.memory_space<vmem>>, %arg7: memref<1x32x512xf32, #tpu.memory_space<vmem>>, %arg8: memref<128x512xf32, #tpu.memory_space<vmem>>) attributes {dimension_semantics = [#tpu.dimension_semantics<parallel>], iteration_bounds = array<i64: 2>, scalar_prefetch = 0 : i64, scratch_operands = 1 : i64, tpu.core_type = #tpu.core_type<tc>, window_params = [{pipeline_mode = #tpu.pipeline_mode<synchronous>, transform_indices = @transform_0, window_bounds = array<i64: 32, 128>}, {pipeline_mode = #tpu.pipeline_mode<synchronous>, transform_indices = @transform_1, window_bounds = array<i64: 32, 1>}, {pipeline_mode = #tpu.pipeline_mode<synchronous>, transform_indices = @transform_2, window_bounds = array<i64: 128, 512>}, {transform_indices = @transform_3, window_bounds = array<i64: 1, 4, 512>}, {transform_indices = @transform_4, window_bounds = array<i64: 1, 32, 512>}, {transform_indices = @transform_5, window_bounds = array<i64: 1, 32, 512>}, {transform_indices = @transform_6, window_bounds = array<i64: 1, 32, 512>}]} {
    %c0 = arith.constant 0 : index
    %c0_0 = arith.constant 0 : index
    %c0_1 = arith.constant 0 : index
    %0 = vector.load %arg4[%c0, %c0_0, %c0_1] : memref<1x4x512xf32, #tpu.memory_space<vmem>>, vector<1x4x512xf32>
    %1 = vector.shape_cast %0 : vector<1x4x512xf32> to vector<4x512xf32>
    %cst = arith.constant 0.000000e+00 : f32
    %2 = vector.broadcast %cst : f32 to vector<128x512xf32>
    %c0_2 = arith.constant 0 : index
    %c0_3 = arith.constant 0 : index
    %3 = vector.load %arg8[%c0_2, %c0_3] : memref<128x512xf32, #tpu.memory_space<vmem>>, vector<128x512xf32>
    tpu.vector_store %arg8[%c0_2, %c0_3], %2 {strides = array<i32>} : memref<128x512xf32, #tpu.memory_space<vmem>>, vector<128x512xf32>,
    %c0_4 = arith.constant 0 : index
    %c0_5 = arith.constant 0 : index
    %4 = vector.load %arg8[%c0_4, %c0_5] : memref<128x512xf32, #tpu.memory_space<vmem>>, vector<4x512xf32>
    tpu.vector_store %arg8[%c0_4, %c0_5], %1 {strides = array<i32>} : memref<128x512xf32, #tpu.memory_space<vmem>>, vector<4x512xf32>,
    %5 = vector.extract_strided_slice %1 {offsets = [0, 1], sizes = [4, 511], strides = [1, 1]} : vector<4x512xf32> to vector<4x511xf32>
    %c4 = arith.constant 4 : index
    %c0_6 = arith.constant 0 : index
    %6 = vector.load %arg8[%c4, %c0_6] : memref<128x512xf32, #tpu.memory_space<vmem>>, vector<4x511xf32>
    tpu.vector_store %arg8[%c4, %c0_6], %5 {strides = array<i32>} : memref<128x512xf32, #tpu.memory_space<vmem>>, vector<4x511xf32>,
    %7 = vector.extract_strided_slice %1 {offsets = [0, 8], sizes = [4, 504], strides = [1, 1]} : vector<4x512xf32> to vector<4x504xf32>
    %c8 = arith.constant 8 : index
    %c0_7 = arith.constant 0 : index
    %8 = vector.load %arg8[%c8, %c0_7] : memref<128x512xf32, #tpu.memory_space<vmem>>, vector<4x504xf32>
    tpu.vector_store %arg8[%c8, %c0_7], %7 {strides = array<i32>} : memref<128x512xf32, #tpu.memory_space<vmem>>, vector<4x504xf32>,
    %9 = vector.extract_strided_slice %1 {offsets = [0, 9], sizes = [4, 503], strides = [1, 1]} : vector<4x512xf32> to vector<4x503xf32>
    %c12 = arith.constant 12 : index
    %c0_8 = arith.constant 0 : index
    %10 = vector.load %arg8[%c12, %c0_8] : memref<128x512xf32, #tpu.memory_space<vmem>>, vector<4x503xf32>
    tpu.vector_store %arg8[%c12, %c0_8], %9 {strides = array<i32>} : memref<128x512xf32, #tpu.memory_space<vmem>>, vector<4x503xf32>,
    %11 = vector.extract_strided_slice %1 {offsets = [0, 64], sizes = [4, 448], strides = [1, 1]} : vector<4x512xf32> to vector<4x448xf32>
    %c16 = arith.constant 16 : index
    %c0_9 = arith.constant 0 : index
    %12 = vector.load %arg8[%c16, %c0_9] : memref<128x512xf32, #tpu.memory_space<vmem>>, vector<4x448xf32>
    tpu.vector_store %arg8[%c16, %c0_9], %11 {strides = array<i32>} : memref<128x512xf32, #tpu.memory_space<vmem>>, vector<4x448xf32>,
    %13 = vector.extract_strided_slice %1 {offsets = [0, 65], sizes = [4, 447], strides = [1, 1]} : vector<4x512xf32> to vector<4x447xf32>
    %c20 = arith.constant 20 : index
    %c0_10 = arith.constant 0 : index
    %14 = vector.load %arg8[%c20, %c0_10] : memref<128x512xf32, #tpu.memory_space<vmem>>, vector<4x447xf32>
    tpu.vector_store %arg8[%c20, %c0_10], %13 {strides = array<i32>} : memref<128x512xf32, #tpu.memory_space<vmem>>, vector<4x447xf32>,
    %15 = vector.extract_strided_slice %1 {offsets = [0, 72], sizes = [4, 440], strides = [1, 1]} : vector<4x512xf32> to vector<4x440xf32>
    %c24 = arith.constant 24 : index
    %c0_11 = arith.constant 0 : index
    %16 = vector.load %arg8[%c24, %c0_11] : memref<128x512xf32, #tpu.memory_space<vmem>>, vector<4x440xf32>
    tpu.vector_store %arg8[%c24, %c0_11], %15 {strides = array<i32>} : memref<128x512xf32, #tpu.memory_space<vmem>>, vector<4x440xf32>,
    %17 = vector.extract_strided_slice %1 {offsets = [0, 73], sizes = [4, 439], strides = [1, 1]} : vector<4x512xf32> to vector<4x439xf32>
    %c28 = arith.constant 28 : index
    %c0_12 = arith.constant 0 : index
    %18 = vector.load %arg8[%c28, %c0_12] : memref<128x512xf32, #tpu.memory_space<vmem>>, vector<4x439xf32>
    tpu.vector_store %arg8[%c28, %c0_12], %17 {strides = array<i32>} : memref<128x512xf32, #tpu.memory_space<vmem>>, vector<4x439xf32>,
    %c0_13 = arith.constant 0 : index
    %c0_14 = arith.constant 0 : index
    %19 = vector.load %arg8[%c0_13, %c0_14] : memref<128x512xf32, #tpu.memory_space<vmem>>, vector<128x512xf32>
    %c0_15 = arith.constant 0 : index
    %c0_16 = arith.constant 0 : index
    %20 = vector.load %arg3[%c0_15, %c0_16] : memref<128x512xf32, #tpu.memory_space<vmem>>, vector<128x512xf32>
    %21 = arith.mulf %19, %20 : vector<128x512xf32>
    %c0_17 = arith.constant 0 : index
    %c0_18 = arith.constant 0 : index
    %22 = vector.load %arg1[%c0_17, %c0_18] : memref<32x128xf32, #tpu.memory_space<vmem>>, vector<32x128xf32>
    %cst_19 = arith.constant dense<0.000000e+00> : vector<32x512xf32>
    %23 = tpu.matmul %22, %21, %cst_19 {dimension_numbers = #tpu.dot_dimension_numbers<[1], [0], [0], [1], [0, 0, 1, 1], [], []>} : vector<32x128xf32>, vector<128x512xf32>, vector<32x512xf32> -> vector<32x512xf32>
    %c0_20 = arith.constant 0 : index
    %c0_21 = arith.constant 0 : index
    %24 = vector.load %arg2[%c0_20, %c0_21] : memref<32x1xf32, #tpu.memory_space<vmem>>, vector<32x1xf32>
    %25 = vector.broadcast %24 : vector<32x1xf32> to vector<32x512xf32>
    %26 = arith.addf %23, %25 : vector<32x512xf32>
    %cst_22 = arith.constant 0.000000e+00 : f32
    %27 = vector.broadcast %cst_22 : f32 to vector<32x512xf32>
    %28 = arith.cmpf oge, %26, %27 : vector<32x512xf32>
    %cst_23 = arith.constant 5.000000e-02 : f32
    %29 = vector.broadcast %cst_23 : f32 to vector<32x512xf32>
    %30 = arith.mulf %29, %26 : vector<32x512xf32>
    %31 = arith.select %28, %26, %30 : vector<32x512xi1>, vector<32x512xf32>
    %c0_24 = arith.constant 0 : index
    %c0_25 = arith.constant 0 : index
    %c0_26 = arith.constant 0 : index
    %32 = vector.load %arg6[%c0_24, %c0_25, %c0_26] : memref<1x32x512xf32, #tpu.memory_space<vmem>>, vector<1x32x512xf32>
    %33 = vector.shape_cast %32 : vector<1x32x512xf32> to vector<32x512xf32>
    %34 = vector.shape_cast %31 : vector<32x512xf32> to vector<1x32x512xf32>
    tpu.vector_store %arg6[%c0_24, %c0_25, %c0_26], %34 {strides = array<i32>} : memref<1x32x512xf32, #tpu.memory_space<vmem>>, vector<1x32x512xf32>,
    %c0_27 = arith.constant 0 : index
    %c0_28 = arith.constant 0 : index
    %c0_29 = arith.constant 0 : index
    %35 = vector.load %arg5[%c0_27, %c0_28, %c0_29] : memref<1x32x512xf32, #tpu.memory_space<vmem>>, vector<1x32x512xf32>
    %36 = vector.shape_cast %35 : vector<1x32x512xf32> to vector<32x512xf32>
    %cst_30 = arith.constant 0.000000e+00 : f32
    %37 = vector.broadcast %cst_30 : f32 to vector<32x512xf32>
    %38 = arith.cmpf oge, %36, %37 : vector<32x512xf32>
    %cst_31 = arith.constant 5.000000e-02 : f32
    %39 = vector.broadcast %cst_31 : f32 to vector<32x512xf32>
    %40 = arith.mulf %39, %36 : vector<32x512xf32>
    %41 = arith.select %38, %36, %40 : vector<32x512xi1>, vector<32x512xf32>
    %c0_32 = arith.constant 0 : index
    %c0_33 = arith.constant 0 : index
    %c0_34 = arith.constant 0 : index
    %42 = vector.load %arg7[%c0_32, %c0_33, %c0_34] : memref<1x32x512xf32, #tpu.memory_space<vmem>>, vector<1x32x512xf32>
    %43 = vector.shape_cast %42 : vector<1x32x512xf32> to vector<32x512xf32>
    %44 = vector.shape_cast %41 : vector<32x512xf32> to vector<1x32x512xf32>
    tpu.vector_store %arg7[%c0_32, %c0_33, %c0_34], %44 {strides = array<i32>} : memref<1x32x512xf32, #tpu.memory_space<vmem>>, vector<1x32x512xf32>,
    return
  }
  func.func @transform_0(%arg0: i32) -> (i32, i32) {
    %c0_i32 = arith.constant 0 : i32
    %c0_i32_0 = arith.constant 0 : i32
    %c0_i32_1 = arith.constant 0 : i32
    return %c0_i32, %c0_i32_0 : i32, i32
  }
  func.func @transform_1(%arg0: i32) -> (i32, i32) {
    %c0_i32 = arith.constant 0 : i32
    %c0_i32_0 = arith.constant 0 : i32
    %c0_i32_1 = arith.constant 0 : i32
    return %c0_i32, %c0_i32_0 : i32, i32
  }
  func.func @transform_2(%arg0: i32) -> (i32, i32) {
    %c0_i32 = arith.constant 0 : i32
    %c0_i32_0 = arith.constant 0 : i32
    %c0_i32_1 = arith.constant 0 : i32
    return %c0_i32, %c0_i32_0 : i32, i32
  }
  func.func @transform_3(%arg0: i32) -> (i32, i32, i32) {
    %c0_i32 = arith.constant 0 : i32
    %c0_i32_0 = arith.constant 0 : i32
    %c0_i32_1 = arith.constant 0 : i32
    return %arg0, %c0_i32, %c0_i32_0 : i32, i32, i32
  }
  func.func @transform_4(%arg0: i32) -> (i32, i32, i32) {
    %c0_i32 = arith.constant 0 : i32
    %c0_i32_0 = arith.constant 0 : i32
    %c0_i32_1 = arith.constant 0 : i32
    return %arg0, %c0_i32, %c0_i32_0 : i32, i32, i32
  }
  func.func @transform_5(%arg0: i32) -> (i32, i32, i32) {
    %c0_i32 = arith.constant 0 : i32
    %c0_i32_0 = arith.constant 0 : i32
    %c0_i32_1 = arith.constant 0 : i32
    return %arg0, %c0_i32, %c0_i32_0 : i32, i32, i32
  }
  func.func @transform_6(%arg0: i32) -> (i32, i32, i32) {
    %c0_i32 = arith.constant 0 : i32
    %c0_i32_0 = arith.constant 0 : i32
    %c0_i32_1 = arith.constant 0 : i32
    return %arg0, %c0_i32, %c0_i32_0 : i32, i32, i32
  }
}

</mosaic_0001>

<llo_original>
// kernel: spatial_up_sampling.1
$region0: #{spatial_up_sampling.1}
  #allocation0 [shape = 'u32[]', space=smem, size = 0x4, offset = 0x4, fixed_abs, tag = 'smem constant byte address 0x4 - core index']
  #allocation1 [shape = 'u32[72,128]{1,0:T(1,128)}', space=vmem, size = 0x9000, scoped, tag = 'internal scratch']
  #allocation2 [shape = 'f32[128,512]{1,0:T(8,128)}', space=vmem, size = 0x40000, scoped, tag = 'scratch operand']
  %s0 = inlined_call_operand.hbm [shape: f32[32,128], index: 0, kind: input, shape index: {}]
  %s1 = inlined_call_operand.vmem [shape: f32[32,1], index: 1, kind: input, shape index: {}]
  %s2 = inlined_call_operand.hbm [shape: f32[128,512], index: 2, kind: input, shape index: {}]
  %s3 = inlined_call_operand.vmem [shape: f32[2,4,512], index: 3, kind: input, shape index: {}]
  %s4 = inlined_call_operand.vmem [shape: f32[2,32,512], index: 4, kind: input, shape index: {}]
  %s5 = inlined_call_operand.vmem [shape: f32[2,32,512], index: 5, kind: output, shape index: {0}]
  %s6 = inlined_call_operand.vmem [shape: f32[2,32,512], index: 6, kind: output, shape index: {1}]
  %7 = xla_tuple %s5, %s6
  %s8 = sld [smem:[#allocation0]]
  $region69: #{spatial_up_sampling.1} parent=0
    _
  %s10 = ssub.s32 1, %s8
  %s11 = scalar_select 0, %s10, %s8
  $region1: #{spatial_up_sampling.1} parent=0
    #allocation3 [shape = 'u8[16384]{0}', space=vmem, size = 0x4000, scoped, tag = 'input window, operand 0, single buffered']
    #allocation4 [shape = 's32[2]{0}', space=sflag, size = 0x8, scoped, tag = 'scoped memory for spatial_up_sampling.1']
    #allocation5 [shape = 'u8[262144]{0}', space=vmem, size = 0x40000, scoped, tag = 'input window, operand 2, single buffered']
    #allocation6 [shape = 's32[1]{0}', space=sflag, size = 0x4, scoped, tag = 'scoped memory for spatial_up_sampling.1']
    %12 = vsyncpa [#allocation4], 0
    %13 = vsyncpa [#allocation6], 0
    loop: start=0, step=1, limit=4
    $region2: #{spatial_up_sampling.1} parent=1 // loop_pre_header
      _
    $region3: #{spatial_up_sampling.1} parent=1 // loop_header
      %s15 = sphi 0, %s19
      %p16 = scmp.ge.s32.totalorder %s15, 4
      %s23 = sphi 0, %s23
      %s25 = sphi 0, %s23
      %s26 = sphi 0, %s25
      %s40 = sphi 0, %s26
      %s44 = sphi 0, %s44
      %s46 = sphi 0, %s44
      %s47 = sphi 0, %s46
      %s61 = sphi 0, %s47
      %s65 = sphi 0, %s65
      %s67 = sphi 0, %s65
      %s68 = sphi 0, %s67
      %s82 = sphi 0, %s68
      %s88 = sphi 0, %s90
      %s91 = sphi 0, %s88
      %s92 = sphi 0, %s91
      %s108 = sphi 0, %s92
      %s114 = sphi 0, %s116
      %s117 = sphi 0, %s114
      %s118 = sphi 0, %s117
      %s134 = sphi 0, %s118
      %s140 = sphi 0, %s142
      %s143 = sphi 0, %s140
      %s144 = sphi 0, %s143
      %s160 = sphi 0, %s144
      %s166 = sphi 0, %s168
      %s169 = sphi 0, %s166
      %s170 = sphi 0, %s169
      %s186 = sphi 0, %s170
    $region4: #{spatial_up_sampling.1} parent=1 // loop_header_branch
      %18 = sbr.rel (%p16) target = $region8
    $region5: #{spatial_up_sampling.1} parent=1 // loop_body
      %s20 = ssub.s32 %s15, 1
      %s21 = ssub.s32 %s15, 2
      %s22 = sadd.s32 %s15, 1
      %s24 = sadd.s32 %s23, 1
      %p27 = scmp.eq.s32.totalorder %s15, 1
      %p28 = scmp.ne.s32.totalorder %s23, %s25
      %p29 = scmp.eq.s32.totalorder %s15, 0
      %p30 = por %p28, %p29
      %p31 = scmp.ne.s32.totalorder %s23, %s25
      %p32 = scmp.eq.s32.totalorder %s20, 1
      %p33 = por %p31, %p32
      %p34 = scmp.ne.s32.totalorder %s25, %s26
      %p35 = scmp.eq.s32.totalorder %s20, 0
      %p36 = por %p34, %p35
      %p37 = scmp.ne.s32.totalorder %s25, %s26
      %p38 = scmp.eq.s32.totalorder %s21, 1
      %p39 = por %p37, %p38
      %p41 = scmp.ne.s32.totalorder %s26, %s40
      %p42 = scmp.eq.s32.totalorder %s21, 0
      %p43 = por %p41, %p42
      %s45 = sadd.s32 %s44, 1
      %p48 = scmp.eq.s32.totalorder %s15, 1
      %p49 = scmp.ne.s32.totalorder %s44, %s46
      %p50 = scmp.eq.s32.totalorder %s15, 0
      %p51 = por %p49, %p50
      %p52 = scmp.ne.s32.totalorder %s44, %s46
      %p53 = scmp.eq.s32.totalorder %s20, 1
      %p54 = por %p52, %p53
      %p55 = scmp.ne.s32.totalorder %s46, %s47
      %p56 = scmp.eq.s32.totalorder %s20, 0
      %p57 = por %p55, %p56
      %p58 = scmp.ne.s32.totalorder %s46, %s47
      %p59 = scmp.eq.s32.totalorder %s21, 1
      %p60 = por %p58, %p59
      %p62 = scmp.ne.s32.totalorder %s47, %s61
      %p63 = scmp.eq.s32.totalorder %s21, 0
      %p64 = por %p62, %p63
      %s66 = sadd.s32 %s65, 1
      %p69 = scmp.eq.s32.totalorder %s15, 1
      %p70 = scmp.ne.s32.totalorder %s65, %s67
      %p71 = scmp.eq.s32.totalorder %s15, 0
      %p72 = por %p70, %p71
      %p73 = scmp.ne.s32.totalorder %s65, %s67
      %p74 = scmp.eq.s32.totalorder %s20, 1
      %p75 = por %p73, %p74
      %p76 = scmp.ne.s32.totalorder %s67, %s68
      %p77 = scmp.eq.s32.totalorder %s20, 0
      %p78 = por %p76, %p77
      %p79 = scmp.ne.s32.totalorder %s67, %s68
      %p80 = scmp.eq.s32.totalorder %s21, 1
      %p81 = por %p79, %p80
      %p83 = scmp.ne.s32.totalorder %s68, %s82
      %p84 = scmp.eq.s32.totalorder %s21, 0
      %p85 = por %p83, %p84
      %s86 = ssub.s32 %s15, %s22
      %p87 = scmp.eq.s32.totalorder %s86, 0
      %s89 = sadd.s32 %s88, 1
      %s90 = scalar_select %p87, %s88, %s89
      %p93 = pneg %p87
      %p94 = scmp.eq.s32.totalorder %s15, 1
      %p95 = por %p93, %p94
      %p96 = scmp.ne.s32.totalorder %s88, %s91
      %p97 = scmp.eq.s32.totalorder %s15, 0
      %p98 = por %p96, %p97
      %p99 = scmp.ne.s32.totalorder %s88, %s91
      %p100 = scmp.eq.s32.totalorder %s20, 1
      %p101 = por %p99, %p100
      %p102 = scmp.ne.s32.totalorder %s91, %s92
      %p103 = scmp.eq.s32.totalorder %s20, 0
      %p104 = por %p102, %p103
      %p105 = scmp.ne.s32.totalorder %s91, %s92
      %p106 = scmp.eq.s32.totalorder %s21, 1
      %p107 = por %p105, %p106
      %p109 = scmp.ne.s32.totalorder %s92, %s108
      %p110 = scmp.eq.s32.totalorder %s21, 0
      %p111 = por %p109, %p110
      %s112 = ssub.s32 %s15, %s22
      %p113 = scmp.eq.s32.totalorder %s112, 0
      %s115 = sadd.s32 %s114, 1
      %s116 = scalar_select %p113, %s114, %s115
      %p119 = pneg %p113
      %p120 = scmp.eq.s32.totalorder %s15, 1
      %p121 = por %p119, %p120
      %p122 = scmp.ne.s32.totalorder %s114, %s117
      %p123 = scmp.eq.s32.totalorder %s15, 0
      %p124 = por %p122, %p123
      %p125 = scmp.ne.s32.totalorder %s114, %s117
      %p126 = scmp.eq.s32.totalorder %s20, 1
      %p127 = por %p125, %p126
      %p128 = scmp.ne.s32.totalorder %s117, %s118
      %p129 = scmp.eq.s32.totalorder %s20, 0
      %p130 = por %p128, %p129
      %p131 = scmp.ne.s32.totalorder %s117, %s118
      %p132 = scmp.eq.s32.totalorder %s21, 1
      %p133 = por %p131, %p132
      %p135 = scmp.ne.s32.totalorder %s118, %s134
      %p136 = scmp.eq.s32.totalorder %s21, 0
      %p137 = por %p135, %p136
      %s138 = ssub.s32 %s15, %s22
      %p139 = scmp.eq.s32.totalorder %s138, 0
      %s141 = sadd.s32 %s140, 1
      %s142 = scalar_select %p139, %s140, %s141
      %p145 = pneg %p139
      %p146 = scmp.eq.s32.totalorder %s15, 1
      %p147 = por %p145, %p146
      %p148 = scmp.ne.s32.totalorder %s140, %s143
      %p149 = scmp.eq.s32.totalorder %s15, 0
      %p150 = por %p148, %p149
      %p151 = scmp.ne.s32.totalorder %s140, %s143
      %p152 = scmp.eq.s32.totalorder %s20, 1
      %p153 = por %p151, %p152
      %p154 = scmp.ne.s32.totalorder %s143, %s144
      %p155 = scmp.eq.s32.totalorder %s20, 0
      %p156 = por %p154, %p155
      %p157 = scmp.ne.s32.totalorder %s143, %s144
      %p158 = scmp.eq.s32.totalorder %s21, 1
      %p159 = por %p157, %p158
      %p161 = scmp.ne.s32.totalorder %s144, %s160
      %p162 = scmp.eq.s32.totalorder %s21, 0
      %p163 = por %p161, %p162
      %s164 = ssub.s32 %s15, %s22
      %p165 = scmp.eq.s32.totalorder %s164, 0
      %s167 = sadd.s32 %s166, 1
      %s168 = scalar_select %p165, %s166, %s167
      %p171 = pneg %p165
      %p172 = scmp.eq.s32.totalorder %s15, 1
      %p173 = por %p171, %p172
      %p174 = scmp.ne.s32.totalorder %s166, %s169
      %p175 = scmp.eq.s32.totalorder %s15, 0
      %p176 = por %p174, %p175
      %p177 = scmp.ne.s32.totalorder %s166, %s169
      %p178 = scmp.eq.s32.totalorder %s20, 1
      %p179 = por %p177, %p178
      %p180 = scmp.ne.s32.totalorder %s169, %s170
      %p181 = scmp.eq.s32.totalorder %s20, 0
      %p182 = por %p180, %p181
      %p183 = scmp.ne.s32.totalorder %s169, %s170
      %p184 = scmp.eq.s32.totalorder %s21, 1
      %p185 = por %p183, %p184
      %p187 = scmp.ne.s32.totalorder %s170, %s186
      %p188 = scmp.eq.s32.totalorder %s21, 0
      %p189 = por %p187, %p188
      %p190 = scmp.le.s32.totalorder 1, %s15
      %p191 = scmp.lt.s32.totalorder %s15, 3
      %p192 = pnand %p190, %p191
      %p193 = pneg %p192
      // Predicated region
      $region9: #{spatial_up_sampling.1} parent=5 // pred_check
        _
      $region10: #{spatial_up_sampling.1} parent=5 // pred_check_branch
        %195 = sbr.rel (%p192) target = $region12
      $region11: #{spatial_up_sampling.1} parent=5 // pred_region
        %s196 = ssub.s32 %s15, 1
        // Predicated region
        $region13: #{spatial_up_sampling.1} parent=11 // pred_check
          %p197 = pneg %p36
        $region14: #{spatial_up_sampling.1} parent=11 // pred_check_branch
          %199 = sbr.rel (%p197) target = $region16
        $region15: #{spatial_up_sampling.1} parent=11 // pred_region
          %201 = vsyncadd [#allocation4], 0
          %s202 = sshll.u32 %s0, 4
          %s203 = int_to_ptr.hbm [resolvable:$true] %s202
          %s204 = sshll.u32 [#allocation3], 4
          %s205 = int_to_ptr.vmem [resolvable:$true] %s204
          %210 = dma.hbm_to_vmem [thread:$0]  %s203, 512, %s205, [#allocation4], 128, 128, 8
        $region16: #{spatial_up_sampling.1} parent=11 // pred_fallthru
          _
        // Predicated region
        $region17: #{spatial_up_sampling.1} parent=11 // pred_check
          %p211 = pneg %p57
        $region18: #{spatial_up_sampling.1} parent=11 // pred_check_branch
          %213 = sbr.rel (%p211) target = $region20
        $region19: #{spatial_up_sampling.1} parent=11 // pred_region
          _
        $region20: #{spatial_up_sampling.1} parent=11 // pred_fallthru
          _
        // Predicated region
        $region21: #{spatial_up_sampling.1} parent=11 // pred_check
          %p214 = pneg %p78
        $region22: #{spatial_up_sampling.1} parent=11 // pred_check_branch
          %216 = sbr.rel (%p214) target = $region24
        $region23: #{spatial_up_sampling.1} parent=11 // pred_region
          %218 = vsyncadd [#allocation6], 0
          %s219 = sshll.u32 %s2, 4
          %s220 = int_to_ptr.hbm [resolvable:$true] %s219
          %s221 = sshll.u32 [#allocation5], 4
          %s222 = int_to_ptr.vmem [resolvable:$true] %s221
          %227 = dma.hbm_to_vmem [thread:$0]  %s220, 8192, %s222, [#allocation6], 512, 512, 32
        $region24: #{spatial_up_sampling.1} parent=11 // pred_fallthru
          _
      $region12: #{spatial_up_sampling.1} parent=5 // pred_fallthru
        _
      %p228 = scmp.lt.s32.totalorder %s15, 2
      // Predicated region
      $region25: #{spatial_up_sampling.1} parent=5 // pred_check
        %p229 = pneg %p228
      $region26: #{spatial_up_sampling.1} parent=5 // pred_check_branch
        %231 = sbr.rel (%p229) target = $region28
      $region27: #{spatial_up_sampling.1} parent=5 // pred_region
        // Predicated region
        $region29: #{spatial_up_sampling.1} parent=27 // pred_check
          %p232 = pneg %p98
        $region30: #{spatial_up_sampling.1} parent=27 // pred_check_branch
          %234 = sbr.rel (%p232) target = $region32
        $region31: #{spatial_up_sampling.1} parent=27 // pred_region
          %p235 = scmp.lt.s32.totalorder %s15, 1
          %s236 = scalar_select %p235, %s15, 1
          %s237 = smul.addr %s236, 4
          %s238 = smul.addr %s237, 4
          %s239 = scalar_lea.vmem %s3, %s238
        $region32: #{spatial_up_sampling.1} parent=27 // pred_fallthru
          _
        // Predicated region
        $region33: #{spatial_up_sampling.1} parent=27 // pred_check
          %p240 = pneg %p124
        $region34: #{spatial_up_sampling.1} parent=27 // pred_check_branch
          %242 = sbr.rel (%p240) target = $region36
        $region35: #{spatial_up_sampling.1} parent=27 // pred_region
          %p243 = scmp.lt.s32.totalorder %s15, 1
          %s244 = scalar_select %p243, %s15, 1
          %s245 = smul.addr %s244, 16
          %s246 = smul.addr %s245, 8
          %s247 = scalar_lea.vmem %s4, %s246
        $region36: #{spatial_up_sampling.1} parent=27 // pred_fallthru
          _
      $region28: #{spatial_up_sampling.1} parent=5 // pred_fallthru
        _
      %p248 = scmp.le.s32.totalorder 1, %s15
      %p249 = scmp.lt.s32.totalorder %s15, 3
      %p250 = pnand %p248, %p249
      %p251 = pneg %p250
      // Predicated region
      $region37: #{spatial_up_sampling.1} parent=5 // pred_check
        _
      $region38: #{spatial_up_sampling.1} parent=5 // pred_check_branch
        %253 = sbr.rel (%p250) target = $region40
      $region39: #{spatial_up_sampling.1} parent=5 // pred_region
        %s254 = ssub.s32 %s15, 1
        // Predicated region
        $region41: #{spatial_up_sampling.1} parent=39 // pred_check
          %p255 = pneg %p36
        $region42: #{spatial_up_sampling.1} parent=39 // pred_check_branch
          %257 = sbr.rel (%p255) target = $region44
        $region43: #{spatial_up_sampling.1} parent=39 // pred_region
          %259 = dma.done [#allocation4], 512
        $region44: #{spatial_up_sampling.1} parent=39 // pred_fallthru
          _
        // Predicated region
        $region45: #{spatial_up_sampling.1} parent=39 // pred_check
          %p260 = pneg %p78
        $region46: #{spatial_up_sampling.1} parent=39 // pred_check_branch
          %262 = sbr.rel (%p260) target = $region48
        $region47: #{spatial_up_sampling.1} parent=39 // pred_region
          %264 = dma.done [#allocation6], 8192
        $region48: #{spatial_up_sampling.1} parent=39 // pred_fallthru
          _
        %p265 = pneg %p36
        %p266 = pneg %p33
        %p267 = pneg %p57
        %p268 = pneg %p54
        %p269 = pneg %p78
        %p270 = pneg %p75
        %p271 = scmp.lt.s32.totalorder %s20, 1
        %s272 = scalar_select %p271, %s20, 1
        %s273 = smul.addr %s272, 4
        %s274 = smul.addr %s273, 4
        %s275 = scalar_lea.vmem %s3, %s274
        %p276 = pneg %p104
        %p277 = pneg %p101
        %p278 = scmp.lt.s32.totalorder %s20, 1
        %s279 = scalar_select %p278, %s20, 1
        %s280 = smul.addr %s279, 16
        %s281 = smul.addr %s280, 8
        %s282 = scalar_lea.vmem %s4, %s281
        %p283 = pneg %p130
        %p284 = pneg %p127
        %p285 = pneg %p156
        %p286 = pneg %p153
        %p287 = scmp.lt.s32.totalorder %s20, 1
        %s288 = scalar_select %p287, %s20, 1
        %s289 = smul.addr %s288, 16
        %s290 = smul.addr %s289, 8
        %s291 = scalar_lea.vmem %s5, %s290
        %p292 = pneg %p182
        %p293 = pneg %p179
        %p294 = scmp.lt.s32.totalorder %s20, 1
        %s295 = scalar_select %p294, %s20, 1
        %s296 = smul.addr %s295, 16
        %s297 = smul.addr %s296, 8
        %s298 = scalar_lea.vmem %s6, %s297
        %p299 = scmp.lt.s32.totalorder %s20, 1
        %s300 = scalar_select %p299, %s20, 1
        %s301 = smul.addr %s300, 4
        %s302 = smul.addr %s301, 4
        %s303 = scalar_lea.vmem %s3, %s302
        %p304 = scmp.lt.s32.totalorder %s20, 1
        %s305 = scalar_select %p304, %s20, 1
        %s306 = smul.addr %s305, 16
        %s307 = smul.addr %s306, 8
        %s308 = scalar_lea.vmem %s4, %s307
        %p309 = scmp.lt.s32.totalorder %s20, 1
        %s310 = scalar_select %p309, %s20, 1
        %s311 = smul.addr %s310, 16
        %s312 = smul.addr %s311, 8
        %s313 = scalar_lea.vmem %s5, %s312
        %p314 = scmp.lt.s32.totalorder %s20, 1
        %s315 = scalar_select %p314, %s20, 1
        %s316 = smul.addr %s315, 16
        %s317 = smul.addr %s316, 8
        %s318 = scalar_lea.vmem %s6, %s317
        %v319 = vld [vmem:[%s303] sm:$0xff]
        %v320 = vld [vmem:[%s303 + $0x8] sm:$0xff]
        %321 = vst [vmem:[#allocation2] sm:$0xff] 0.0
        %322 = vst [vmem:[#allocation2 + $0x8] sm:$0xff] 0.0
        %323 = vst [vmem:[#allocation2 + $0x10] sm:$0xff] 0.0
        %324 = vst [vmem:[#allocation2 + $0x18] sm:$0xff] 0.0
        %325 = vst [vmem:[#allocation2 + $0x20] sm:$0xff] 0.0
        %326 = vst [vmem:[#allocation2 + $0x28] sm:$0xff] 0.0
        %327 = vst [vmem:[#allocation2 + $0x30] sm:$0xff] 0.0
        %328 = vst [vmem:[#allocation2 + $0x38] sm:$0xff] 0.0
        %329 = vst [vmem:[#allocation2 + $0x40] sm:$0xff] 0.0
        %330 = vst [vmem:[#allocation2 + $0x48] sm:$0xff] 0.0
        %331 = vst [vmem:[#allocation2 + $0x50] sm:$0xff] 0.0
        %332 = vst [vmem:[#allocation2 + $0x58] sm:$0xff] 0.0
        %333 = vst [vmem:[#allocation2 + $0x60] sm:$0xff] 0.0
        %334 = vst [vmem:[#allocation2 + $0x68] sm:$0xff] 0.0
        %335 = vst [vmem:[#allocation2 + $0x70] sm:$0xff] 0.0
        %336 = vst [vmem:[#allocation2 + $0x78] sm:$0xff] 0.0
        %337 = vst [vmem:[#allocation2 + $0x80] sm:$0xff] 0.0
        %338 = vst [vmem:[#allocation2 + $0x88] sm:$0xff] 0.0
        %339 = vst [vmem:[#allocation2 + $0x90] sm:$0xff] 0.0
        %340 = vst [vmem:[#allocation2 + $0x98] sm:$0xff] 0.0
        %341 = vst [vmem:[#allocation2 + $0xa0] sm:$0xff] 0.0
        %342 = vst [vmem:[#allocation2 + $0xa8] sm:$0xff] 0.0
        %343 = vst [vmem:[#allocation2 + $0xb0] sm:$0xff] 0.0
        %344 = vst [vmem:[#allocation2 + $0xb8] sm:$0xff] 0.0
        %345 = vst [vmem:[#allocation2 + $0xc0] sm:$0xff] 0.0
        %346 = vst [vmem:[#allocation2 + $0xc8] sm:$0xff] 0.0
        %347 = vst [vmem:[#allocation2 + $0xd0] sm:$0xff] 0.0
        %348 = vst [vmem:[#allocation2 + $0xd8] sm:$0xff] 0.0
        %349 = vst [vmem:[#allocation2 + $0xe0] sm:$0xff] 0.0
        %350 = vst [vmem:[#allocation2 + $0xe8] sm:$0xff] 0.0
        %351 = vst [vmem:[#allocation2 + $0xf0] sm:$0xff] 0.0
        %352 = vst [vmem:[#allocation2 + $0xf8] sm:$0xff] 0.0
        %353 = vst [vmem:[#allocation2 + $0x100] sm:$0xff] 0.0
        %354 = vst [vmem:[#allocation2 + $0x108] sm:$0xff] 0.0
        %355 = vst [vmem:[#allocation2 + $0x110] sm:$0xff] 0.0
        %356 = vst [vmem:[#allocation2 + $0x118] sm:$0xff] 0.0
        %357 = vst [vmem:[#allocation2 + $0x120] sm:$0xff] 0.0
        %358 = vst [vmem:[#allocation2 + $0x128] sm:$0xff] 0.0
        %359 = vst [vmem:[#allocation2 + $0x130] sm:$0xff] 0.0
        %360 = vst [vmem:[#allocation2 + $0x138] sm:$0xff] 0.0
        %361 = vst [vmem:[#allocation2 + $0x140] sm:$0xff] 0.0
        %362 = vst [vmem:[#allocation2 + $0x148] sm:$0xff] 0.0
        %363 = vst [vmem:[#allocation2 + $0x150] sm:$0xff] 0.0
        %364 = vst [vmem:[#allocation2 + $0x158] sm:$0xff] 0.0
        %365 = vst [vmem:[#allocation2 + $0x160] sm:$0xff] 0.0
        %366 = vst [vmem:[#allocation2 + $0x168] sm:$0xff] 0.0
        %367 = vst [vmem:[#allocation2 + $0x170] sm:$0xff] 0.0
        %368 = vst [vmem:[#allocation2 + $0x178] sm:$0xff] 0.0
        %369 = vst [vmem:[#allocation2 + $0x180] sm:$0xff] 0.0
        %370 = vst [vmem:[#allocation2 + $0x188] sm:$0xff] 0.0
        %371 = vst [vmem:[#allocation2 + $0x190] sm:$0xff] 0.0
        %372 = vst [vmem:[#allocation2 + $0x198] sm:$0xff] 0.0
        %373 = vst [vmem:[#allocation2 + $0x1a0] sm:$0xff] 0.0
        %374 = vst [vmem:[#allocation2 + $0x1a8] sm:$0xff] 0.0
        %375 = vst [vmem:[#allocation2 + $0x1b0] sm:$0xff] 0.0
        %376 = vst [vmem:[#allocation2 + $0x1b8] sm:$0xff] 0.0
        %377 = vst [vmem:[#allocation2 + $0x1c0] sm:$0xff] 0.0
        %378 = vst [vmem:[#allocation2 + $0x1c8] sm:$0xff] 0.0
        %379 = vst [vmem:[#allocation2 + $0x1d0] sm:$0xff] 0.0
        %380 = vst [vmem:[#allocation2 + $0x1d8] sm:$0xff] 0.0
        %381 = vst [vmem:[#allocation2 + $0x1e0] sm:$0xff] 0.0
        %382 = vst [vmem:[#allocation2 + $0x1e8] sm:$0xff] 0.0
        %383 = vst [vmem:[#allocation2 + $0x1f0] sm:$0xff] 0.0
        %384 = vst [vmem:[#allocation2 + $0x1f8] sm:$0xff] 0.0
        %387 = vst [vmem:[#allocation1] ss:$2 sm:$0xff] %v319
        %s388 = scalar_lea.vmem [#allocation1], 16
        %389 = vst [vmem:[%s388] ss:$2 sm:$0xff] %v320
        %v390 = vld.sshfl [vmem:[#allocation1] sm:$0xff pattern:$0x75316420]
        %v391 = vld.sshfl [vmem:[#allocation1 + $0x8] sm:$0xff pattern:$0x75316420]
        %v392 = vld.sshfl [vmem:[#allocation1 + $0x10] sm:$0xff pattern:$0x75316420]
        %v393 = vld.sshfl [vmem:[#allocation1 + $0x18] sm:$0xff pattern:$0x75316420]
        %398 = vst [vmem:[#allocation2] sm:$0xf] %v390
        %399 = vst [vmem:[#allocation2 + $0x8] sm:$0xf] %v391
        %400 = vst [vmem:[#allocation2 + $0x10] sm:$0xf] %v392
        %401 = vst [vmem:[#allocation2 + $0x18] sm:$0xf] %v393
        %s402 = scalar_lea.vmem [#allocation1], 1
        %403 = vst [vmem:[%s402] ss:$2 sm:$0xff] %v319
        %s404 = scalar_lea.vmem [#allocation1], 17
        %405 = vst [vmem:[%s404] ss:$2 sm:$0xff] %v320
        %v406 = vld.sshfl [vmem:[#allocation1] sm:$0xff pattern:$0x75316420]
        %v407 = vld.sshfl [vmem:[#allocation1 + $0x8] sm:$0xff pattern:$0x75316420]
        %v408 = vld.sshfl [vmem:[#allocation1 + $0x10] sm:$0xff pattern:$0x75316420]
        %v409 = vld.sshfl [vmem:[#allocation1 + $0x18] sm:$0xff pattern:$0x75316420]
        %410 = vrot.lane.b32.xlu0 %v406, 127
        %v411 = vpop.permute.xlu0 %410
        %412 = vrot.lane.b32.xlu0 %v407, 127
        %v413 = vpop.permute.xlu0 %412
        %414 = vrot.lane.b32.xlu0 %v408, 127
        %v415 = vpop.permute.xlu0 %414
        %416 = vrot.lane.b32.xlu0 %v409, 127
        %v417 = vpop.permute.xlu0 %416
        %vm418 = vcmask 1039360
        %v419 = vsel %vm418, %v411, %v413
        %v420 = vsel %vm418, %v413, %v415
        %v421 = vsel %vm418, %v415, %v417
        %426 = vst [vmem:[#allocation2] sm:$0xf0] %v419
        %427 = vst [vmem:[#allocation2 + $0x8] sm:$0xf0] %v420
        %428 = vst [vmem:[#allocation2 + $0x10] sm:$0xf0] %v421
        %vm429 = vcmask 1039364
        %430 = vst.msk [vmem:[#allocation2 + $0x18] sm:$0xf0] %vm429, %v417
        %431 = vst [vmem:[#allocation1] ss:$2 sm:$0xff] %v319
        %s432 = scalar_lea.vmem [#allocation1], 16
        %433 = vst [vmem:[%s432] ss:$2 sm:$0xff] %v320
        %v434 = vld.sshfl [vmem:[#allocation1] sm:$0xff pattern:$0x75316420]
        %v435 = vld.sshfl [vmem:[#allocation1 + $0x8] sm:$0xff pattern:$0x75316420]
        %v436 = vld.sshfl [vmem:[#allocation1 + $0x10] sm:$0xff pattern:$0x75316420]
        %v437 = vld.sshfl [vmem:[#allocation1 + $0x18] sm:$0xff pattern:$0x75316420]
        %438 = vrot.lane.b32.xlu0 %v434, 120
        %v439 = vpop.permute.xlu0 %438
        %440 = vrot.lane.b32.xlu0 %v435, 120
        %v441 = vpop.permute.xlu0 %440
        %442 = vrot.lane.b32.xlu0 %v436, 120
        %v443 = vpop.permute.xlu0 %442
        %444 = vrot.lane.b32.xlu0 %v437, 120
        %v445 = vpop.permute.xlu0 %444
        %vm446 = vcmask 982016
        %v447 = vsel %vm446, %v439, %v441
        %v448 = vsel %vm446, %v441, %v443
        %v449 = vsel %vm446, %v443, %v445
        %454 = vst [vmem:[#allocation2 + $0x20] sm:$0xf] %v447
        %455 = vst [vmem:[#allocation2 + $0x28] sm:$0xf] %v448
        %456 = vst [vmem:[#allocation2 + $0x30] sm:$0xf] %v449
        %vm457 = vcmask 977920
        %458 = vst.msk [vmem:[#allocation2 + $0x38] sm:$0xf] %vm457, %v445
        %s459 = scalar_lea.vmem [#allocation1], 1
        %460 = vst [vmem:[%s459] ss:$2 sm:$0xff] %v319
        %s461 = scalar_lea.vmem [#allocation1], 17
        %462 = vst [vmem:[%s461] ss:$2 sm:$0xff] %v320
        %v463 = vld.sshfl [vmem:[#allocation1] sm:$0xff pattern:$0x75316420]
        %v464 = vld.sshfl [vmem:[#allocation1 + $0x8] sm:$0xff pattern:$0x75316420]
        %v465 = vld.sshfl [vmem:[#allocation1 + $0x10] sm:$0xff pattern:$0x75316420]
        %v466 = vld.sshfl [vmem:[#allocation1 + $0x18] sm:$0xff pattern:$0x75316420]
        %467 = vrot.lane.b32.xlu0 %v463, 119
        %v468 = vpop.permute.xlu0 %467
        %469 = vrot.lane.b32.xlu0 %v464, 119
        %v470 = vpop.permute.xlu0 %469
        %471 = vrot.lane.b32.xlu0 %v465, 119
        %v472 = vpop.permute.xlu0 %471
        %473 = vrot.lane.b32.xlu0 %v466, 119
        %v474 = vpop.permute.xlu0 %473
        %vm475 = vcmask 973824
        %v476 = vsel %vm475, %v468, %v470
        %v477 = vsel %vm475, %v470, %v472
        %v478 = vsel %vm475, %v472, %v474
        %483 = vst [vmem:[#allocation2 + $0x20] sm:$0xf0] %v476
        %484 = vst [vmem:[#allocation2 + $0x28] sm:$0xf0] %v477
        %485 = vst [vmem:[#allocation2 + $0x30] sm:$0xf0] %v478
        %vm486 = vcmask 973828
        %487 = vst.msk [vmem:[#allocation2 + $0x38] sm:$0xf0] %vm486, %v474
        %488 = vst [vmem:[#allocation1] ss:$2 sm:$0xff] %v319
        %s489 = scalar_lea.vmem [#allocation1], 16
        %490 = vst [vmem:[%s489] ss:$2 sm:$0xff] %v320
        %v491 = vld.sshfl [vmem:[#allocation1] sm:$0xff pattern:$0x75316420]
        %v492 = vld.sshfl [vmem:[#allocation1 + $0x8] sm:$0xff pattern:$0x75316420]
        %v493 = vld.sshfl [vmem:[#allocation1 + $0x10] sm:$0xff pattern:$0x75316420]
        %v494 = vld.sshfl [vmem:[#allocation1 + $0x18] sm:$0xff pattern:$0x75316420]
        %495 = vrot.lane.b32.xlu0 %v491, 64
        %v496 = vpop.permute.xlu0 %495
        %497 = vrot.lane.b32.xlu0 %v492, 64
        %v498 = vpop.permute.xlu0 %497
        %499 = vrot.lane.b32.xlu0 %v493, 64
        %v500 = vpop.permute.xlu0 %499
        %501 = vrot.lane.b32.xlu0 %v494, 64
        %v502 = vpop.permute.xlu0 %501
        %vm503 = vcmask 523264
        %v504 = vsel %vm503, %v496, %v498
        %v505 = vsel %vm503, %v498, %v500
        %v506 = vsel %vm503, %v500, %v502
        %511 = vst [vmem:[#allocation2 + $0x40] sm:$0xf] %v504
        %512 = vst [vmem:[#allocation2 + $0x48] sm:$0xf] %v505
        %513 = vst [vmem:[#allocation2 + $0x50] sm:$0xf] %v506
        %vm514 = vcmask 519168
        %515 = vst.msk [vmem:[#allocation2 + $0x58] sm:$0xf] %vm514, %v502
        %s516 = scalar_lea.vmem [#allocation1], 1
        %517 = vst [vmem:[%s516] ss:$2 sm:$0xff] %v319
        %s518 = scalar_lea.vmem [#allocation1], 17
        %519 = vst [vmem:[%s518] ss:$2 sm:$0xff] %v320
        %v520 = vld.sshfl [vmem:[#allocation1] sm:$0xff pattern:$0x75316420]
        %v521 = vld.sshfl [vmem:[#allocation1 + $0x8] sm:$0xff pattern:$0x75316420]
        %v522 = vld.sshfl [vmem:[#allocation1 + $0x10] sm:$0xff pattern:$0x75316420]
        %v523 = vld.sshfl [vmem:[#allocation1 + $0x18] sm:$0xff pattern:$0x75316420]
        %524 = vrot.lane.b32.xlu0 %v520, 63
        %v525 = vpop.permute.xlu0 %524
        %526 = vrot.lane.b32.xlu0 %v521, 63
        %v527 = vpop.permute.xlu0 %526
        %528 = vrot.lane.b32.xlu0 %v522, 63
        %v529 = vpop.permute.xlu0 %528
        %530 = vrot.lane.b32.xlu0 %v523, 63
        %v531 = vpop.permute.xlu0 %530
        %vm532 = vcmask 515072
        %v533 = vsel %vm532, %v525, %v527
        %v534 = vsel %vm532, %v527, %v529
        %v535 = vsel %vm532, %v529, %v531
        %540 = vst [vmem:[#allocation2 + $0x40] sm:$0xf0] %v533
        %541 = vst [vmem:[#allocation2 + $0x48] sm:$0xf0] %v534
        %542 = vst [vmem:[#allocation2 + $0x50] sm:$0xf0] %v535
        %vm543 = vcmask 515076
        %544 = vst.msk [vmem:[#allocation2 + $0x58] sm:$0xf0] %vm543, %v531
        %545 = vst [vmem:[#allocation1] ss:$2 sm:$0xff] %v319
        %s546 = scalar_lea.vmem [#allocation1], 16
        %547 = vst [vmem:[%s546] ss:$2 sm:$0xff] %v320
        %v548 = vld.sshfl [vmem:[#allocation1] sm:$0xff pattern:$0x75316420]
        %v549 = vld.sshfl [vmem:[#allocation1 + $0x8] sm:$0xff pattern:$0x75316420]
        %v550 = vld.sshfl [vmem:[#allocation1 + $0x10] sm:$0xff pattern:$0x75316420]
        %v551 = vld.sshfl [vmem:[#allocation1 + $0x18] sm:$0xff pattern:$0x75316420]
        %552 = vrot.lane.b32.xlu0 %v548, 56
        %v553 = vpop.permute.xlu0 %552
        %554 = vrot.lane.b32.xlu0 %v549, 56
        %v555 = vpop.permute.xlu0 %554
        %556 = vrot.lane.b32.xlu0 %v550, 56
        %v557 = vpop.permute.xlu0 %556
        %558 = vrot.lane.b32.xlu0 %v551, 56
        %v559 = vpop.permute.xlu0 %558
        %vm560 = vcmask 457728
        %v561 = vsel %vm560, %v553, %v555
        %v562 = vsel %vm560, %v555, %v557
        %v563 = vsel %vm560, %v557, %v559
        %568 = vst [vmem:[#allocation2 + $0x60] sm:$0xf] %v561
        %569 = vst [vmem:[#allocation2 + $0x68] sm:$0xf] %v562
        %570 = vst [vmem:[#allocation2 + $0x70] sm:$0xf] %v563
        %vm571 = vcmask 453632
        %572 = vst.msk [vmem:[#allocation2 + $0x78] sm:$0xf] %vm571, %v559
        %s573 = scalar_lea.vmem [#allocation1], 1
        %574 = vst [vmem:[%s573] ss:$2 sm:$0xff] %v319
        %s575 = scalar_lea.vmem [#allocation1], 17
        %576 = vst [vmem:[%s575] ss:$2 sm:$0xff] %v320
        %v577 = vld.sshfl [vmem:[#allocation1] sm:$0xff pattern:$0x75316420]
        %v578 = vld.sshfl [vmem:[#allocation1 + $0x8] sm:$0xff pattern:$0x75316420]
        %v579 = vld.sshfl [vmem:[#allocation1 + $0x10] sm:$0xff pattern:$0x75316420]
        %v580 = vld.sshfl [vmem:[#allocation1 + $0x18] sm:$0xff pattern:$0x75316420]
        %581 = vrot.lane.b32.xlu0 %v577, 55
        %v582 = vpop.permute.xlu0 %581
        %583 = vrot.lane.b32.xlu0 %v578, 55
        %v584 = vpop.permute.xlu0 %583
        %585 = vrot.lane.b32.xlu0 %v579, 55
        %v586 = vpop.permute.xlu0 %585
        %587 = vrot.lane.b32.xlu0 %v580, 55
        %v588 = vpop.permute.xlu0 %587
        %vm589 = vcmask 449536
        %v590 = vsel %vm589, %v582, %v584
        %v591 = vsel %vm589, %v584, %v586
        %v592 = vsel %vm589, %v586, %v588
        %597 = vst [vmem:[#allocation2 + $0x60] sm:$0xf0] %v590
        %598 = vst [vmem:[#allocation2 + $0x68] sm:$0xf0] %v591
        %599 = vst [vmem:[#allocation2 + $0x70] sm:$0xf0] %v592
        %vm600 = vcmask 449540
        %601 = vst.msk [vmem:[#allocation2 + $0x78] sm:$0xf0] %vm600, %v588
        %v602 = vld [vmem:[#allocation2] sm:$0xff]
        %v603 = vld [vmem:[#allocation2 + $0x8] sm:$0xff]
        %v604 = vld [vmem:[#allocation2 + $0x10] sm:$0xff]
        %v605 = vld [vmem:[#allocation2 + $0x18] sm:$0xff]
        %v606 = vld [vmem:[#allocation2 + $0x20] sm:$0xff]
        %v607 = vld [vmem:[#allocation2 + $0x28] sm:$0xff]
        %v608 = vld [vmem:[#allocation2 + $0x30] sm:$0xff]
        %v609 = vld [vmem:[#allocation2 + $0x38] sm:$0xff]
        %v610 = vld [vmem:[#allocation2 + $0x40] sm:$0xff]
        %v611 = vld [vmem:[#allocation2 + $0x48] sm:$0xff]
        %v612 = vld [vmem:[#allocation2 + $0x50] sm:$0xff]
        %v613 = vld [vmem:[#allocation2 + $0x58] sm:$0xff]
        %v614 = vld [vmem:[#allocation2 + $0x60] sm:$0xff]
        %v615 = vld [vmem:[#allocation2 + $0x68] sm:$0xff]
        %v616 = vld [vmem:[#allocation2 + $0x70] sm:$0xff]
        %v617 = vld [vmem:[#allocation2 + $0x78] sm:$0xff]
        %v618 = vld [vmem:[#allocation2 + $0x80] sm:$0xff]
        %v619 = vld [vmem:[#allocation2 + $0x88] sm:$0xff]
        %v620 = vld [vmem:[#allocation2 + $0x90] sm:$0xff]
        %v621 = vld [vmem:[#allocation2 + $0x98] sm:$0xff]
        %v622 = vld [vmem:[#allocation2 + $0xa0] sm:$0xff]
        %v623 = vld [vmem:[#allocation2 + $0xa8] sm:$0xff]
        %v624 = vld [vmem:[#allocation2 + $0xb0] sm:$0xff]
        %v625 = vld [vmem:[#allocation2 + $0xb8] sm:$0xff]
        %v626 = vld [vmem:[#allocation2 + $0xc0] sm:$0xff]
        %v627 = vld [vmem:[#allocation2 + $0xc8] sm:$0xff]
        %v628 = vld [vmem:[#allocation2 + $0xd0] sm:$0xff]
        %v629 = vld [vmem:[#allocation2 + $0xd8] sm:$0xff]
        %v630 = vld [vmem:[#allocation2 + $0xe0] sm:$0xff]
        %v631 = vld [vmem:[#allocation2 + $0xe8] sm:$0xff]
        %v632 = vld [vmem:[#allocation2 + $0xf0] sm:$0xff]
        %v633 = vld [vmem:[#allocation2 + $0xf8] sm:$0xff]
        %v634 = vld [vmem:[#allocation2 + $0x100] sm:$0xff]
        %v635 = vld [vmem:[#allocation2 + $0x108] sm:$0xff]
        %v636 = vld [vmem:[#allocation2 + $0x110] sm:$0xff]
        %v637 = vld [vmem:[#allocation2 + $0x118] sm:$0xff]
        %v638 = vld [vmem:[#allocation2 + $0x120] sm:$0xff]
        %v639 = vld [vmem:[#allocation2 + $0x128] sm:$0xff]
        %v640 = vld [vmem:[#allocation2 + $0x130] sm:$0xff]
        %v641 = vld [vmem:[#allocation2 + $0x138] sm:$0xff]
        %v642 = vld [vmem:[#allocation2 + $0x140] sm:$0xff]
        %v643 = vld [vmem:[#allocation2 + $0x148] sm:$0xff]
        %v644 = vld [vmem:[#allocation2 + $0x150] sm:$0xff]
        %v645 = vld [vmem:[#allocation2 + $0x158] sm:$0xff]
        %v646 = vld [vmem:[#allocation2 + $0x160] sm:$0xff]
        %v647 = vld [vmem:[#allocation2 + $0x168] sm:$0xff]
        %v648 = vld [vmem:[#allocation2 + $0x170] sm:$0xff]
        %v649 = vld [vmem:[#allocation2 + $0x178] sm:$0xff]
        %v650 = vld [vmem:[#allocation2 + $0x180] sm:$0xff]
        %v651 = vld [vmem:[#allocation2 + $0x188] sm:$0xff]
        %v652 = vld [vmem:[#allocation2 + $0x190] sm:$0xff]
        %v653 = vld [vmem:[#allocation2 + $0x198] sm:$0xff]
        %v654 = vld [vmem:[#allocation2 + $0x1a0] sm:$0xff]
        %v655 = vld [vmem:[#allocation2 + $0x1a8] sm:$0xff]
        %v656 = vld [vmem:[#allocation2 + $0x1b0] sm:$0xff]
        %v657 = vld [vmem:[#allocation2 + $0x1b8] sm:$0xff]
        %v658 = vld [vmem:[#allocation2 + $0x1c0] sm:$0xff]
        %v659 = vld [vmem:[#allocation2 + $0x1c8] sm:$0xff]
        %v660 = vld [vmem:[#allocation2 + $0x1d0] sm:$0xff]
        %v661 = vld [vmem:[#allocation2 + $0x1d8] sm:$0xff]
        %v662 = vld [vmem:[#allocation2 + $0x1e0] sm:$0xff]
        %v663 = vld [vmem:[#allocation2 + $0x1e8] sm:$0xff]
        %v664 = vld [vmem:[#allocation2 + $0x1f0] sm:$0xff]
        %v665 = vld [vmem:[#allocation2 + $0x1f8] sm:$0xff]
        %v666 = vld [vmem:[#allocation5] sm:$0xff]
        %v667 = vld [vmem:[#allocation5 + $0x8] sm:$0xff]
        %v668 = vld [vmem:[#allocation5 + $0x10] sm:$0xff]
        %v669 = vld [vmem:[#allocation5 + $0x18] sm:$0xff]
        %v670 = vld [vmem:[#allocation5 + $0x20] sm:$0xff]
        %v671 = vld [vmem:[#allocation5 + $0x28] sm:$0xff]
        %v672 = vld [vmem:[#allocation5 + $0x30] sm:$0xff]
        %v673 = vld [vmem:[#allocation5 + $0x38] sm:$0xff]
        %v674 = vld [vmem:[#allocation5 + $0x40] sm:$0xff]
        %v675 = vld [vmem:[#allocation5 + $0x48] sm:$0xff]
        %v676 = vld [vmem:[#allocation5 + $0x50] sm:$0xff]
        %v677 = vld [vmem:[#allocation5 + $0x58] sm:$0xff]
        %v678 = vld [vmem:[#allocation5 + $0x60] sm:$0xff]
        %v679 = vld [vmem:[#allocation5 + $0x68] sm:$0xff]
        %v680 = vld [vmem:[#allocation5 + $0x70] sm:$0xff]
        %v681 = vld [vmem:[#allocation5 + $0x78] sm:$0xff]
        %v682 = vld [vmem:[#allocation5 + $0x80] sm:$0xff]
        %v683 = vld [vmem:[#allocation5 + $0x88] sm:$0xff]
        %v684 = vld [vmem:[#allocation5 + $0x90] sm:$0xff]
        %v685 = vld [vmem:[#allocation5 + $0x98] sm:$0xff]
        %v686 = vld [vmem:[#allocation5 + $0xa0] sm:$0xff]
        %v687 = vld [vmem:[#allocation5 + $0xa8] sm:$0xff]
        %v688 = vld [vmem:[#allocation5 + $0xb0] sm:$0xff]
        %v689 = vld [vmem:[#allocation5 + $0xb8] sm:$0xff]
        %v690 = vld [vmem:[#allocation5 + $0xc0] sm:$0xff]
        %v691 = vld [vmem:[#allocation5 + $0xc8] sm:$0xff]
        %v692 = vld [vmem:[#allocation5 + $0xd0] sm:$0xff]
        %v693 = vld [vmem:[#allocation5 + $0xd8] sm:$0xff]
        %v694 = vld [vmem:[#allocation5 + $0xe0] sm:$0xff]
        %v695 = vld [vmem:[#allocation5 + $0xe8] sm:$0xff]
        %v696 = vld [vmem:[#allocation5 + $0xf0] sm:$0xff]
        %v697 = vld [vmem:[#allocation5 + $0xf8] sm:$0xff]
        %v698 = vld [vmem:[#allocation5 + $0x100] sm:$0xff]
        %v699 = vld [vmem:[#allocation5 + $0x108] sm:$0xff]
        %v700 = vld [vmem:[#allocation5 + $0x110] sm:$0xff]
        %v701 = vld [vmem:[#allocation5 + $0x118] sm:$0xff]
        %v702 = vld [vmem:[#allocation5 + $0x120] sm:$0xff]
        %v703 = vld [vmem:[#allocation5 + $0x128] sm:$0xff]
        %v704 = vld [vmem:[#allocation5 + $0x130] sm:$0xff]
        %v705 = vld [vmem:[#allocation5 + $0x138] sm:$0xff]
        %v706 = vld [vmem:[#allocation5 + $0x140] sm:$0xff]
        %v707 = vld [vmem:[#allocation5 + $0x148] sm:$0xff]
        %v708 = vld [vmem:[#allocation5 + $0x150] sm:$0xff]
        %v709 = vld [vmem:[#allocation5 + $0x158] sm:$0xff]
        %v710 = vld [vmem:[#allocation5 + $0x160] sm:$0xff]
        %v711 = vld [vmem:[#allocation5 + $0x168] sm:$0xff]
        %v712 = vld [vmem:[#allocation5 + $0x170] sm:$0xff]
        %v713 = vld [vmem:[#allocation5 + $0x178] sm:$0xff]
        %v714 = vld [vmem:[#allocation5 + $0x180] sm:$0xff]
        %v715 = vld [vmem:[#allocation5 + $0x188] sm:$0xff]
        %v716 = vld [vmem:[#allocation5 + $0x190] sm:$0xff]
        %v717 = vld [vmem:[#allocation5 + $0x198] sm:$0xff]
        %v718 = vld [vmem:[#allocation5 + $0x1a0] sm:$0xff]
        %v719 = vld [vmem:[#allocation5 + $0x1a8] sm:$0xff]
        %v720 = vld [vmem:[#allocation5 + $0x1b0] sm:$0xff]
        %v721 = vld [vmem:[#allocation5 + $0x1b8] sm:$0xff]
        %v722 = vld [vmem:[#allocation5 + $0x1c0] sm:$0xff]
        %v723 = vld [vmem:[#allocation5 + $0x1c8] sm:$0xff]
        %v724 = vld [vmem:[#allocation5 + $0x1d0] sm:$0xff]
        %v725 = vld [vmem:[#allocation5 + $0x1d8] sm:$0xff]
        %v726 = vld [vmem:[#allocation5 + $0x1e0] sm:$0xff]
        %v727 = vld [vmem:[#allocation5 + $0x1e8] sm:$0xff]
        %v728 = vld [vmem:[#allocation5 + $0x1f0] sm:$0xff]
        %v729 = vld [vmem:[#allocation5 + $0x1f8] sm:$0xff]
        %v730 = vmul.f32 %v602, %v666
        %v731 = vmul.f32 %v603, %v667
        %v732 = vmul.f32 %v604, %v668
        %v733 = vmul.f32 %v605, %v669
        %v734 = vmul.f32 %v606, %v670
        %v735 = vmul.f32 %v607, %v671
        %v736 = vmul.f32 %v608, %v672
        %v737 = vmul.f32 %v609, %v673
        %v738 = vmul.f32 %v610, %v674
        %v739 = vmul.f32 %v611, %v675
        %v740 = vmul.f32 %v612, %v676
        %v741 = vmul.f32 %v613, %v677
        %v742 = vmul.f32 %v614, %v678
        %v743 = vmul.f32 %v615, %v679
        %v744 = vmul.f32 %v616, %v680
        %v745 = vmul.f32 %v617, %v681
        %v746 = vmul.f32 %v618, %v682
        %v747 = vmul.f32 %v619, %v683
        %v748 = vmul.f32 %v620, %v684
        %v749 = vmul.f32 %v621, %v685
        %v750 = vmul.f32 %v622, %v686
        %v751 = vmul.f32 %v623, %v687
        %v752 = vmul.f32 %v624, %v688
        %v753 = vmul.f32 %v625, %v689
        %v754 = vmul.f32 %v626, %v690
        %v755 = vmul.f32 %v627, %v691
        %v756 = vmul.f32 %v628, %v692
        %v757 = vmul.f32 %v629, %v693
        %v758 = vmul.f32 %v630, %v694
        %v759 = vmul.f32 %v631, %v695
        %v760 = vmul.f32 %v632, %v696
        %v761 = vmul.f32 %v633, %v697
        %v762 = vmul.f32 %v634, %v698
        %v763 = vmul.f32 %v635, %v699
        %v764 = vmul.f32 %v636, %v700
        %v765 = vmul.f32 %v637, %v701
        %v766 = vmul.f32 %v638, %v702
        %v767 = vmul.f32 %v639, %v703
        %v768 = vmul.f32 %v640, %v704
        %v769 = vmul.f32 %v641, %v705
        %v770 = vmul.f32 %v642, %v706
        %v771 = vmul.f32 %v643, %v707
        %v772 = vmul.f32 %v644, %v708
        %v773 = vmul.f32 %v645, %v709
        %v774 = vmul.f32 %v646, %v710
        %v775 = vmul.f32 %v647, %v711
        %v776 = vmul.f32 %v648, %v712
        %v777 = vmul.f32 %v649, %v713
        %v778 = vmul.f32 %v650, %v714
        %v779 = vmul.f32 %v651, %v715
        %v780 = vmul.f32 %v652, %v716
        %v781 = vmul.f32 %v653, %v717
        %v782 = vmul.f32 %v654, %v718
        %v783 = vmul.f32 %v655, %v719
        %v784 = vmul.f32 %v656, %v720
        %v785 = vmul.f32 %v657, %v721
        %v786 = vmul.f32 %v658, %v722
        %v787 = vmul.f32 %v659, %v723
        %v788 = vmul.f32 %v660, %v724
        %v789 = vmul.f32 %v661, %v725
        %v790 = vmul.f32 %v662, %v726
        %v791 = vmul.f32 %v663, %v727
        %v792 = vmul.f32 %v664, %v728
        %v793 = vmul.f32 %v665, %v729
        %v794 = vld [vmem:[#allocation3] sm:$0xff]
        %v795 = vld [vmem:[#allocation3 + $0x8] sm:$0xff]
        %v796 = vld [vmem:[#allocation3 + $0x10] sm:$0xff]
        %v797 = vld [vmem:[#allocation3 + $0x18] sm:$0xff]
        %v798 = vld [vmem:[%s1] sm:$0xff]
        %v799 = vld [vmem:[%s1 + $0x8] sm:$0xff]
        %v800 = vld [vmem:[%s1 + $0x10] sm:$0xff]
        %v801 = vld [vmem:[%s1 + $0x18] sm:$0xff]
        %803 = vset.pattern.permute.xlu0 0
        %804 = vperm.xlu0 %803, %v798
        %v805 = vpop.permute.xlu0 %804
        %808 = vset.pattern.permute.xlu0 0
        %809 = vperm.xlu0 %808, %v799
        %v810 = vpop.permute.xlu0 %809
        %813 = vset.pattern.permute.xlu0 0
        %814 = vperm.xlu0 %813, %v800
        %v815 = vpop.permute.xlu0 %814
        %818 = vset.pattern.permute.xlu0 0
        %819 = vperm.xlu0 %818, %v801
        %v820 = vpop.permute.xlu0 %819
        %822 = vmatpush.msra.mxu0 %v790
        %823 = vmatpush.msra.mxu0 %v786
        %824 = vmatpush.msra.mxu0 %v782
        %825 = vmatpush.msra.mxu0 %v778
        %826 = vmatpush.msra.mxu0 %v774
        %827 = vmatpush.msra.mxu0 %v770
        %828 = vmatpush.msra.mxu0 %v766
        %829 = vmatpush.msra.mxu0 %v762
        %830 = vmatpush.msra.mxu0 %v758
        %831 = vmatpush.msra.mxu0 %v754
        %832 = vmatpush.msra.mxu0 %v750
        %833 = vmatpush.msra.mxu0 %v746
        %834 = vmatpush.msra.mxu0 %v742
        %835 = vmatpush.msra.mxu0 %v738
        %836 = vmatpush.msra.mxu0 %v734
        %837 = vmatpush.msra.mxu0 %v730
        %838 = vmatmul.f32.gmra.mxu0 %v794
        %v839 = vpop.f32.mrf.mxu0
        %v840 = vadd.f32 %v805, %v839
        %841 = vmatmul.f32.gmra.mxu0 %v795
        %v842 = vpop.f32.mrf.mxu0
        %v843 = vadd.f32 %v810, %v842
        %844 = vmatmul.f32.gmra.mxu0 %v796
        %v845 = vpop.f32.mrf.mxu0
        %v846 = vadd.f32 %v815, %v845
        %847 = vmatmul.f32.gmra.mxu0 %v797
        %v848 = vpop.f32.mrf.mxu0
        %v849 = vadd.f32 %v820, %v848
        %850 = vdwg.mxu0
        %851 = vmatpush.msra.mxu0 %v791
        %852 = vmatpush.msra.mxu0 %v787
        %853 = vmatpush.msra.mxu0 %v783
        %854 = vmatpush.msra.mxu0 %v779
        %855 = vmatpush.msra.mxu0 %v775
        %856 = vmatpush.msra.mxu0 %v771
        %857 = vmatpush.msra.mxu0 %v767
        %858 = vmatpush.msra.mxu0 %v763
        %859 = vmatpush.msra.mxu0 %v759
        %860 = vmatpush.msra.mxu0 %v755
        %861 = vmatpush.msra.mxu0 %v751
        %862 = vmatpush.msra.mxu0 %v747
        %863 = vmatpush.msra.mxu0 %v743
        %864 = vmatpush.msra.mxu0 %v739
        %865 = vmatpush.msra.mxu0 %v735
        %866 = vmatpush.msra.mxu0 %v731
        %867 = vmatmul.f32.gmra.mxu0 %v794
        %v868 = vpop.f32.mrf.mxu0
        %v869 = vadd.f32 %v805, %v868
        %870 = vmatmul.f32.gmra.mxu0 %v795
        %v871 = vpop.f32.mrf.mxu0
        %v872 = vadd.f32 %v810, %v871
        %873 = vmatmul.f32.gmra.mxu0 %v796
        %v874 = vpop.f32.mrf.mxu0
        %v875 = vadd.f32 %v815, %v874
        %876 = vmatmul.f32.gmra.mxu0 %v797
        %v877 = vpop.f32.mrf.mxu0
        %v878 = vadd.f32 %v820, %v877
        %879 = vdwg.mxu0
        %880 = vmatpush.msra.mxu0 %v792
        %881 = vmatpush.msra.mxu0 %v788
        %882 = vmatpush.msra.mxu0 %v784
        %883 = vmatpush.msra.mxu0 %v780
        %884 = vmatpush.msra.mxu0 %v776
        %885 = vmatpush.msra.mxu0 %v772
        %886 = vmatpush.msra.mxu0 %v768
        %887 = vmatpush.msra.mxu0 %v764
        %888 = vmatpush.msra.mxu0 %v760
        %889 = vmatpush.msra.mxu0 %v756
        %890 = vmatpush.msra.mxu0 %v752
        %891 = vmatpush.msra.mxu0 %v748
        %892 = vmatpush.msra.mxu0 %v744
        %893 = vmatpush.msra.mxu0 %v740
        %894 = vmatpush.msra.mxu0 %v736
        %895 = vmatpush.msra.mxu0 %v732
        %896 = vmatmul.f32.gmra.mxu0 %v794
        %v897 = vpop.f32.mrf.mxu0
        %v898 = vadd.f32 %v805, %v897
        %899 = vmatmul.f32.gmra.mxu0 %v795
        %v900 = vpop.f32.mrf.mxu0
        %v901 = vadd.f32 %v810, %v900
        %902 = vmatmul.f32.gmra.mxu0 %v796
        %v903 = vpop.f32.mrf.mxu0
        %v904 = vadd.f32 %v815, %v903
        %905 = vmatmul.f32.gmra.mxu0 %v797
        %v906 = vpop.f32.mrf.mxu0
        %v907 = vadd.f32 %v820, %v906
        %908 = vdwg.mxu0
        %909 = vmatpush.msra.mxu0 %v793
        %910 = vmatpush.msra.mxu0 %v789
        %911 = vmatpush.msra.mxu0 %v785
        %912 = vmatpush.msra.mxu0 %v781
        %913 = vmatpush.msra.mxu0 %v777
        %914 = vmatpush.msra.mxu0 %v773
        %915 = vmatpush.msra.mxu0 %v769
        %916 = vmatpush.msra.mxu0 %v765
        %917 = vmatpush.msra.mxu0 %v761
        %918 = vmatpush.msra.mxu0 %v757
        %919 = vmatpush.msra.mxu0 %v753
        %920 = vmatpush.msra.mxu0 %v749
        %921 = vmatpush.msra.mxu0 %v745
        %922 = vmatpush.msra.mxu0 %v741
        %923 = vmatpush.msra.mxu0 %v737
        %924 = vmatpush.msra.mxu0 %v733
        %925 = vmatmul.f32.gmra.mxu0 %v794
        %v926 = vpop.f32.mrf.mxu0
        %v927 = vadd.f32 %v805, %v926
        %928 = vmatmul.f32.gmra.mxu0 %v795
        %v929 = vpop.f32.mrf.mxu0
        %v930 = vadd.f32 %v810, %v929
        %931 = vmatmul.f32.gmra.mxu0 %v796
        %v932 = vpop.f32.mrf.mxu0
        %v933 = vadd.f32 %v815, %v932
        %934 = vmatmul.f32.gmra.mxu0 %v797
        %v935 = vpop.f32.mrf.mxu0
        %v936 = vadd.f32 %v820, %v935
        %937 = vdwg.mxu0
        %vm938 = vcmp.ge.f32.partialorder %v840, 0.0
        %vm939 = vcmp.ge.f32.partialorder %v869, 0.0
        %vm940 = vcmp.ge.f32.partialorder %v898, 0.0
        %vm941 = vcmp.ge.f32.partialorder %v927, 0.0
        %vm942 = vcmp.ge.f32.partialorder %v843, 0.0
        %vm943 = vcmp.ge.f32.partialorder %v872, 0.0
        %vm944 = vcmp.ge.f32.partialorder %v901, 0.0
        %vm945 = vcmp.ge.f32.partialorder %v930, 0.0
        %vm946 = vcmp.ge.f32.partialorder %v846, 0.0
        %vm947 = vcmp.ge.f32.partialorder %v875, 0.0
        %vm948 = vcmp.ge.f32.partialorder %v904, 0.0
        %vm949 = vcmp.ge.f32.partialorder %v933, 0.0
        %vm950 = vcmp.ge.f32.partialorder %v849, 0.0
        %vm951 = vcmp.ge.f32.partialorder %v878, 0.0
        %vm952 = vcmp.ge.f32.partialorder %v907, 0.0
        %vm953 = vcmp.ge.f32.partialorder %v936, 0.0
        %v954 = vmul.f32 %v840, 0.05
        %v955 = vmul.f32 %v869, 0.05
        %v956 = vmul.f32 %v898, 0.05
        %v957 = vmul.f32 %v927, 0.05
        %v958 = vmul.f32 %v843, 0.05
        %v959 = vmul.f32 %v872, 0.05
        %v960 = vmul.f32 %v901, 0.05
        %v961 = vmul.f32 %v930, 0.05
        %v962 = vmul.f32 %v846, 0.05
        %v963 = vmul.f32 %v875, 0.05
        %v964 = vmul.f32 %v904, 0.05
        %v965 = vmul.f32 %v933, 0.05
        %v966 = vmul.f32 %v849, 0.05
        %v967 = vmul.f32 %v878, 0.05
        %v968 = vmul.f32 %v907, 0.05
        %v969 = vmul.f32 %v936, 0.05
        %v970 = vsel %vm938, %v840, %v954
        %v971 = vsel %vm939, %v869, %v955
        %v972 = vsel %vm940, %v898, %v956
        %v973 = vsel %vm941, %v927, %v957
        %v974 = vsel %vm942, %v843, %v958
        %v975 = vsel %vm943, %v872, %v959
        %v976 = vsel %vm944, %v901, %v960
        %v977 = vsel %vm945, %v930, %v961
        %v978 = vsel %vm946, %v846, %v962
        %v979 = vsel %vm947, %v875, %v963
        %v980 = vsel %vm948, %v904, %v964
        %v981 = vsel %vm949, %v933, %v965
        %v982 = vsel %vm950, %v849, %v966
        %v983 = vsel %vm951, %v878, %v967
        %v984 = vsel %vm952, %v907, %v968
        %v985 = vsel %vm953, %v936, %v969
        %986 = vst [vmem:[%s313] sm:$0xff] %v970
        %987 = vst [vmem:[%s313 + $0x8] sm:$0xff] %v971
        %988 = vst [vmem:[%s313 + $0x10] sm:$0xff] %v972
        %989 = vst [vmem:[%s313 + $0x18] sm:$0xff] %v973
        %990 = vst [vmem:[%s313 + $0x20] sm:$0xff] %v974
        %991 = vst [vmem:[%s313 + $0x28] sm:$0xff] %v975
        %992 = vst [vmem:[%s313 + $0x30] sm:$0xff] %v976
        %993 = vst [vmem:[%s313 + $0x38] sm:$0xff] %v977
        %994 = vst [vmem:[%s313 + $0x40] sm:$0xff] %v978
        %995 = vst [vmem:[%s313 + $0x48] sm:$0xff] %v979
        %996 = vst [vmem:[%s313 + $0x50] sm:$0xff] %v980
        %997 = vst [vmem:[%s313 + $0x58] sm:$0xff] %v981
        %998 = vst [vmem:[%s313 + $0x60] sm:$0xff] %v982
        %999 = vst [vmem:[%s313 + $0x68] sm:$0xff] %v983
        %1000 = vst [vmem:[%s313 + $0x70] sm:$0xff] %v984
        %1001 = vst [vmem:[%s313 + $0x78] sm:$0xff] %v985
        %v1002 = vld [vmem:[%s308] sm:$0xff]
        %v1003 = vld [vmem:[%s308 + $0x8] sm:$0xff]
        %v1004 = vld [vmem:[%s308 + $0x10] sm:$0xff]
        %v1005 = vld [vmem:[%s308 + $0x18] sm:$0xff]
        %v1006 = vld [vmem:[%s308 + $0x20] sm:$0xff]
        %v1007 = vld [vmem:[%s308 + $0x28] sm:$0xff]
        %v1008 = vld [vmem:[%s308 + $0x30] sm:$0xff]
        %v1009 = vld [vmem:[%s308 + $0x38] sm:$0xff]
        %v1010 = vld [vmem:[%s308 + $0x40] sm:$0xff]
        %v1011 = vld [vmem:[%s308 + $0x48] sm:$0xff]
        %v1012 = vld [vmem:[%s308 + $0x50] sm:$0xff]
        %v1013 = vld [vmem:[%s308 + $0x58] sm:$0xff]
        %v1014 = vld [vmem:[%s308 + $0x60] sm:$0xff]
        %v1015 = vld [vmem:[%s308 + $0x68] sm:$0xff]
        %v1016 = vld [vmem:[%s308 + $0x70] sm:$0xff]
        %v1017 = vld [vmem:[%s308 + $0x78] sm:$0xff]
        %vm1018 = vcmp.ge.f32.partialorder %v1002, 0.0
        %vm1019 = vcmp.ge.f32.partialorder %v1003, 0.0
        %vm1020 = vcmp.ge.f32.partialorder %v1004, 0.0
        %vm1021 = vcmp.ge.f32.partialorder %v1005, 0.0
        %vm1022 = vcmp.ge.f32.partialorder %v1006, 0.0
        %vm1023 = vcmp.ge.f32.partialorder %v1007, 0.0
        %vm1024 = vcmp.ge.f32.partialorder %v1008, 0.0
        %vm1025 = vcmp.ge.f32.partialorder %v1009, 0.0
        %vm1026 = vcmp.ge.f32.partialorder %v1010, 0.0
        %vm1027 = vcmp.ge.f32.partialorder %v1011, 0.0
        %vm1028 = vcmp.ge.f32.partialorder %v1012, 0.0
        %vm1029 = vcmp.ge.f32.partialorder %v1013, 0.0
        %vm1030 = vcmp.ge.f32.partialorder %v1014, 0.0
        %vm1031 = vcmp.ge.f32.partialorder %v1015, 0.0
        %vm1032 = vcmp.ge.f32.partialorder %v1016, 0.0
        %vm1033 = vcmp.ge.f32.partialorder %v1017, 0.0
        %v1034 = vmul.f32 %v1002, 0.05
        %v1035 = vmul.f32 %v1003, 0.05
        %v1036 = vmul.f32 %v1004, 0.05
        %v1037 = vmul.f32 %v1005, 0.05
        %v1038 = vmul.f32 %v1006, 0.05
        %v1039 = vmul.f32 %v1007, 0.05
        %v1040 = vmul.f32 %v1008, 0.05
        %v1041 = vmul.f32 %v1009, 0.05
        %v1042 = vmul.f32 %v1010, 0.05
        %v1043 = vmul.f32 %v1011, 0.05
        %v1044 = vmul.f32 %v1012, 0.05
        %v1045 = vmul.f32 %v1013, 0.05
        %v1046 = vmul.f32 %v1014, 0.05
        %v1047 = vmul.f32 %v1015, 0.05
        %v1048 = vmul.f32 %v1016, 0.05
        %v1049 = vmul.f32 %v1017, 0.05
        %v1050 = vsel %vm1018, %v1002, %v1034
        %v1051 = vsel %vm1019, %v1003, %v1035
        %v1052 = vsel %vm1020, %v1004, %v1036
        %v1053 = vsel %vm1021, %v1005, %v1037
        %v1054 = vsel %vm1022, %v1006, %v1038
        %v1055 = vsel %vm1023, %v1007, %v1039
        %v1056 = vsel %vm1024, %v1008, %v1040
        %v1057 = vsel %vm1025, %v1009, %v1041
        %v1058 = vsel %vm1026, %v1010, %v1042
        %v1059 = vsel %vm1027, %v1011, %v1043
        %v1060 = vsel %vm1028, %v1012, %v1044
        %v1061 = vsel %vm1029, %v1013, %v1045
        %v1062 = vsel %vm1030, %v1014, %v1046
        %v1063 = vsel %vm1031, %v1015, %v1047
        %v1064 = vsel %vm1032, %v1016, %v1048
        %v1065 = vsel %vm1033, %v1017, %v1049
        %1066 = vst [vmem:[%s318] sm:$0xff] %v1050
        %1067 = vst [vmem:[%s318 + $0x8] sm:$0xff] %v1051
        %1068 = vst [vmem:[%s318 + $0x10] sm:$0xff] %v1052
        %1069 = vst [vmem:[%s318 + $0x18] sm:$0xff] %v1053
        %1070 = vst [vmem:[%s318 + $0x20] sm:$0xff] %v1054
        %1071 = vst [vmem:[%s318 + $0x28] sm:$0xff] %v1055
        %1072 = vst [vmem:[%s318 + $0x30] sm:$0xff] %v1056
        %1073 = vst [vmem:[%s318 + $0x38] sm:$0xff] %v1057
        %1074 = vst [vmem:[%s318 + $0x40] sm:$0xff] %v1058
        %1075 = vst [vmem:[%s318 + $0x48] sm:$0xff] %v1059
        %1076 = vst [vmem:[%s318 + $0x50] sm:$0xff] %v1060
        %1077 = vst [vmem:[%s318 + $0x58] sm:$0xff] %v1061
        %1078 = vst [vmem:[%s318 + $0x60] sm:$0xff] %v1062
        %1079 = vst [vmem:[%s318 + $0x68] sm:$0xff] %v1063
        %1080 = vst [vmem:[%s318 + $0x70] sm:$0xff] %v1064
        %1081 = vst [vmem:[%s318 + $0x78] sm:$0xff] %v1065
        %p1082 = scmp.lt.s32.totalorder %s20, 1
        %s1083 = scalar_select %p1082, %s20, 1
        %s1084 = smul.addr %s1083, 16
        %s1085 = smul.addr %s1084, 8
        %s1086 = scalar_lea.vmem %s5, %s1085
        %p1087 = scmp.lt.s32.totalorder %s20, 1
        %s1088 = scalar_select %p1087, %s20, 1
        %s1089 = smul.addr %s1088, 16
        %s1090 = smul.addr %s1089, 8
        %s1091 = scalar_lea.vmem %s6, %s1090
        // Predicated region
        $region49: #{spatial_up_sampling.1} parent=39 // pred_check
          %p1092 = pneg %p153
        $region50: #{spatial_up_sampling.1} parent=39 // pred_check_branch
          %1094 = sbr.rel (%p1092) target = $region52
        $region51: #{spatial_up_sampling.1} parent=39 // pred_region
          _
        $region52: #{spatial_up_sampling.1} parent=39 // pred_fallthru
          _
        // Predicated region
        $region53: #{spatial_up_sampling.1} parent=39 // pred_check
          %p1095 = pneg %p179
        $region54: #{spatial_up_sampling.1} parent=39 // pred_check_branch
          %1097 = sbr.rel (%p1095) target = $region56
        $region55: #{spatial_up_sampling.1} parent=39 // pred_region
          _
        $region56: #{spatial_up_sampling.1} parent=39 // pred_fallthru
          _
      $region40: #{spatial_up_sampling.1} parent=5 // pred_fallthru
        _
      %p1098 = scmp.le.s32.totalorder 2, %s15
      // Predicated region
      $region57: #{spatial_up_sampling.1} parent=5 // pred_check
        %p1099 = pneg %p1098
      $region58: #{spatial_up_sampling.1} parent=5 // pred_check_branch
        %1101 = sbr.rel (%p1099) target = $region60
      $region59: #{spatial_up_sampling.1} parent=5 // pred_region
        %s1102 = ssub.s32 %s15, 2
        // Predicated region
        $region61: #{spatial_up_sampling.1} parent=59 // pred_check
          %p1103 = pneg %p159
        $region62: #{spatial_up_sampling.1} parent=59 // pred_check_branch
          %1105 = sbr.rel (%p1103) target = $region64
        $region63: #{spatial_up_sampling.1} parent=59 // pred_region
          %p1106 = scmp.lt.s32.totalorder %s21, 1
          %s1107 = scalar_select %p1106, %s21, 1
          %s1108 = smul.addr %s1107, 16
          %s1109 = smul.addr %s1108, 8
          %s1110 = scalar_lea.vmem %s5, %s1109
        $region64: #{spatial_up_sampling.1} parent=59 // pred_fallthru
          _
        // Predicated region
        $region65: #{spatial_up_sampling.1} parent=59 // pred_check
          %p1111 = pneg %p185
        $region66: #{spatial_up_sampling.1} parent=59 // pred_check_branch
          %1113 = sbr.rel (%p1111) target = $region68
        $region67: #{spatial_up_sampling.1} parent=59 // pred_region
          %p1114 = scmp.lt.s32.totalorder %s21, 1
          %s1115 = scalar_select %p1114, %s21, 1
          %s1116 = smul.addr %s1115, 16
          %s1117 = smul.addr %s1116, 8
          %s1118 = scalar_lea.vmem %s6, %s1117
        $region68: #{spatial_up_sampling.1} parent=59 // pred_fallthru
          _
      $region60: #{spatial_up_sampling.1} parent=5 // pred_fallthru
        _
    $region6: #{spatial_up_sampling.1} parent=1 // loop_footer
      %s19 = sadd.s32 1, %s15
    $region7: #{spatial_up_sampling.1} parent=1 // loop_footer_branch
      %14 = sbr.rel target = $region3
    $region8: #{spatial_up_sampling.1} parent=1 // loop_exit
      _
    %1119 = vsyncpa [#allocation4], 1
    %s1120 = scalar_lea.sflag [#allocation4], 1
    %1121 = vsyncpa %s1120, 1
    %1122 = vsyncpa [#allocation6], 1

</llo_original>
